<compile_context>
chip_gen: v6e
topology: v6e:2x2x1
jax: 0.10.0
libtpu: 0.0.40
codegen_flags: <defaults>
</compile_context>

<pallas_src>
import functools

import jax
import jax.numpy as jnp
from jax.experimental import pallas as pl
from jax.experimental.pallas import tpu as pltpu

LANE = 128
ROW_ALIGN = 16        # sublane multiple valid for both f32 (8) and bf16 (16)
MAX_TILE_ROWS = 4096  # 4096 * 128 * 4B = 2 MiB per f32 input tile


def _round_up(x, m):
    return (x + m - 1) // m * m


def _bce_dice_sums_kernel(pred_ref, truth_ref, out_ref, acc_ref, *,
                          rows, tile_rows, masked):
    """Accumulates [sum(bce), sum(p*t), sum(p)+sum(t)] over the grid."""
    i = pl.program_id(0)

    @pl.when(i == 0)
    def _init():
        acc_ref[...] = jnp.zeros_like(acc_ref)

    p = pred_ref[...].astype(jnp.float32)
    t = truth_ref[...].astype(jnp.float32)

    if masked:
        # Only the last grid step has a partial tile; zeroing its out-of-range
        # rows (which hold unspecified data) makes their contribution to every
        # sum exactly 0 (bce(0,0)=0).
        row = jax.lax.broadcasted_iota(jnp.int32, (tile_rows, LANE), 0)
        valid = (i * tile_rows + row) < rows
        p = jnp.where(valid, p, 0.0)
        t = jnp.where(valid, t, 0.0)

    # nn.BCELoss clamps log terms at -100 for numerical stability.
    log_p = jnp.maximum(jnp.log(p), -100.0)
    log_1mp = jnp.maximum(jnp.log(1.0 - p), -100.0)
    # -(t*log_p + (1-t)*log_1mp), rewritten with one fewer multiply.
    bce_elem = t * (log_1mp - log_p) - log_1mp

    sub = tile_rows // 8

    def _part(x):
        # (tile_rows, 128) -> (tile_rows//8, 8, 128); sum over leading axis is
        # pure vreg-wise VPU adds (no cross-lane movement).
        return jnp.sum(x.reshape(sub, 8, LANE), axis=0)

    acc_ref[0] += _part(bce_elem)
    acc_ref[1] += _part(p * t)
    acc_ref[2] += _part(p + t)

    @pl.when(i == pl.num_programs(0) - 1)
    def _finalize():
        out_ref[0] = jnp.sum(acc_ref[0])
        out_ref[1] = jnp.sum(acc_ref[1])
        out_ref[2] = jnp.sum(acc_ref[2])


def bce_dice_loss(inputs, target):
    """JAX/Pallas equivalent of BCEDiceLoss.forward(input, target)."""
    if inputs.ndim != 4:
        raise ValueError(
            "Invalid input shape, we expect BxNxHxW. Got: {}".format(inputs.shape))
    if inputs.shape[-2:] != target.shape[-2:]:
        raise ValueError(
            "input and target shapes must be the same. Got: {}".format(inputs.shape))

    n = int(inputs.size)

    def _to2d(x):
        # Stream f32 / bf16 directly; anything else is cast to f32 once.
        if x.dtype not in (jnp.float32, jnp.bfloat16):
            x = x.astype(jnp.float32)
        flat = x.reshape(-1)
        lane_pad = (-n) % LANE
        if lane_pad:
            # Rare sub-128 tail; zero elements contribute 0 to every sum.
            flat = jnp.pad(flat, (0, lane_pad))
        return flat.reshape(-1, LANE)

    pred2 = _to2d(inputs)
    truth2 = _to2d(target)
    rows = pred2.shape[0]

    tile_rows = min(MAX_TILE_ROWS, _round_up(rows, ROW_ALIGN))
    if rows < tile_rows:
        # Small input: pad a handful of zero rows so the single block is full.
        pad_rows = tile_rows - rows
        pred2 = jnp.pad(pred2, ((0, pad_rows), (0, 0)))
        truth2 = jnp.pad(truth2, ((0, pad_rows), (0, 0)))
        rows = tile_rows

    num_blocks = pl.cdiv(rows, tile_rows)
    masked = (rows % tile_rows) != 0  # static: only large, unaligned inputs

    kernel = functools.partial(
        _bce_dice_sums_kernel, rows=rows, tile_rows=tile_rows, masked=masked)

    sums = pl.pallas_call(
        kernel,
        out_shape=jax.ShapeDtypeStruct((3,), jnp.float32),
        grid_spec=pltpu.PrefetchScalarGridSpec(
            num_scalar_prefetch=0,
            grid=(num_blocks,),
            in_specs=[
                pl.BlockSpec((tile_rows, LANE), lambda i: (i, 0)),
                pl.BlockSpec((tile_rows, LANE), lambda i: (i, 0)),
            ],
            out_specs=pl.BlockSpec(memory_space=pltpu.SMEM),
            scratch_shapes=[pltpu.VMEM((3, 8, LANE), jnp.float32)],
        ),
        compiler_params=pltpu.CompilerParams(
            dimension_semantics=("arbitrary",),
            vmem_limit_bytes=32 * 1024 * 1024,
        ),
    )(pred2, truth2)

    bce_sum, inter_sum, pt_sum = sums[0], sums[1], sums[2]

    bce_loss = bce_sum / jnp.float32(n)
    dice_coef = (2.0 * inter_sum + 1.0) / (pt_sum + 1.0)
    return bce_loss + (1.0 - dice_coef)


def _reference(inputs, target):
    p = inputs.reshape(-1).astype(jnp.float32)
    t = target.reshape(-1).astype(jnp.float32)
    log_p = jnp.maximum(jnp.log(p), -100.0)
    log_1mp = jnp.maximum(jnp.log(1.0 - p), -100.0)
    bce = jnp.mean(-(t * log_p + (1.0 - t) * log_1mp))
    dice = (2.0 * jnp.sum(p * t) + 1.0) / (jnp.sum(p) + jnp.sum(t) + 1.0)
    return bce + (1.0 - dice)


if __name__ == "__main__":
    key = jax.random.PRNGKey(0)
    k1, k2, k3, k4 = jax.random.split(key, 4)

    # Main small-shape test (B x N x H x W, post-sigmoid predictions in [0,1]).
    B, C, H, W = 2, 4, 16, 16
    x = jax.nn.sigmoid(jax.random.normal(k1, (B, C, H, W), dtype=jnp.float32))
    y = (jax.random.uniform(k2, (B, C, H, W)) > 0.5).astype(jnp.float32)
    loss = jax.block_until_ready(bce_dice_loss(x, y))
    ref = _reference(x, y)
    assert jnp.allclose(loss, ref, rtol=1e-5, atol=1e-5), (loss, ref)

    # Ragged shape exercising the lane-tail / row-padding path.
    x2 = jax.nn.sigmoid(jax.random.normal(k3, (1, 3, 5, 7), dtype=jnp.float32))
    y2 = (jax.random.uniform(k4, (1, 3, 5, 7)) > 0.5).astype(jnp.float32)
    loss2 = jax.block_until_ready(bce_dice_loss(x2, y2))
    ref2 = _reference(x2, y2)
    assert jnp.allclose(loss2, ref2, rtol=1e-5, atol=1e-5), (loss2, ref2)

    print("KERNEL_OK")
</pallas_src>

<mosaic_0001>
module attributes {stable_mosaic.version = 11 : i64} {
  func.func @_bce_dice_sums_kernel(%arg0: i32, %arg1: memref<16x128xf32, #tpu.memory_space<vmem>>, %arg2: memref<16x128xf32, #tpu.memory_space<vmem>>, %arg3: memref<3xf32, #tpu.memory_space<smem>>, %arg4: memref<3x8x128xf32, #tpu.memory_space<vmem>>) attributes {dimension_semantics = [#tpu.dimension_semantics<arbitrary>], iteration_bounds = array<i64: 1>, scalar_prefetch = 0 : i64, scratch_operands = 1 : i64, tpu.core_type = #tpu.core_type<tc>, window_params = [{transform_indices = @transform_0, window_bounds = array<i64: 16, 128>}, {transform_indices = @transform_1, window_bounds = array<i64: 16, 128>}, {transform_indices = @transform_2, window_bounds = array<i64: 3>}]} {
    %c0_i32 = arith.constant 0 : i32
    %0 = arith.cmpi eq, %arg0, %c0_i32 : i32
    %1 = arith.extui %0 : i1 to i32
    %c0_i32_0 = arith.constant 0 : i32
    %2 = arith.cmpi ne, %1, %c0_i32_0 : i32
    scf.if %2 {
      %cst_27 = arith.constant 0.000000e+00 : f32
      %45 = vector.broadcast %cst_27 : f32 to vector<3x8x128xf32>
      %c0_28 = arith.constant 0 : index
      %c0_29 = arith.constant 0 : index
      %c0_30 = arith.constant 0 : index
      %46 = vector.load %arg4[%c0_28, %c0_29, %c0_30] : memref<3x8x128xf32, #tpu.memory_space<vmem>>, vector<3x8x128xf32>
      tpu.vector_store %arg4[%c0_28, %c0_29, %c0_30], %45 {strides = array<i32>} : memref<3x8x128xf32, #tpu.memory_space<vmem>>, vector<3x8x128xf32>,
    } else {
    }
    %c0 = arith.constant 0 : index
    %c0_1 = arith.constant 0 : index
    %3 = vector.load %arg1[%c0, %c0_1] : memref<16x128xf32, #tpu.memory_space<vmem>>, vector<16x128xf32>
    %c0_2 = arith.constant 0 : index
    %c0_3 = arith.constant 0 : index
    %4 = vector.load %arg2[%c0_2, %c0_3] : memref<16x128xf32, #tpu.memory_space<vmem>>, vector<16x128xf32>
    %5 = math.log %3 : vector<16x128xf32>
    %cst = arith.constant -1.000000e+02 : f32
    %6 = vector.broadcast %cst : f32 to vector<16x128xf32>
    %7 = arith.maximumf %5, %6 : vector<16x128xf32>
    %cst_4 = arith.constant 1.000000e+00 : f32
    %8 = vector.broadcast %cst_4 : f32 to vector<16x128xf32>
    %9 = arith.subf %8, %3 : vector<16x128xf32>
    %10 = math.log %9 : vector<16x128xf32>
    %cst_5 = arith.constant -1.000000e+02 : f32
    %11 = vector.broadcast %cst_5 : f32 to vector<16x128xf32>
    %12 = arith.maximumf %10, %11 : vector<16x128xf32>
    %13 = arith.subf %12, %7 : vector<16x128xf32>
    %14 = arith.mulf %4, %13 : vector<16x128xf32>
    %15 = arith.subf %14, %12 : vector<16x128xf32>
    %c0_6 = arith.constant 0 : index
    %c0_7 = arith.constant 0 : index
    %c0_8 = arith.constant 0 : index
    %16 = vector.load %arg4[%c0_6, %c0_7, %c0_8] : memref<3x8x128xf32, #tpu.memory_space<vmem>>, vector<1x8x128xf32>
    %17 = vector.shape_cast %16 : vector<1x8x128xf32> to vector<8x128xf32>
    %18 = vector.shape_cast %15 : vector<16x128xf32> to vector<2x8x128xf32>
    %cst_9 = arith.constant dense<0.000000e+00> : vector<8x128xf32>
    %19 = vector.multi_reduction <add>, %18, %cst_9 [0] : vector<2x8x128xf32> to vector<8x128xf32>
    %20 = arith.addf %17, %19 : vector<8x128xf32>
    %c0_10 = arith.constant 0 : index
    %c0_11 = arith.constant 0 : index
    %c0_12 = arith.constant 0 : index
    %21 = vector.load %arg4[%c0_10, %c0_11, %c0_12] : memref<3x8x128xf32, #tpu.memory_space<vmem>>, vector<1x8x128xf32>
    %22 = vector.shape_cast %21 : vector<1x8x128xf32> to vector<8x128xf32>
    %23 = vector.shape_cast %20 : vector<8x128xf32> to vector<1x8x128xf32>
    tpu.vector_store %arg4[%c0_10, %c0_11, %c0_12], %23 {strides = array<i32>} : memref<3x8x128xf32, #tpu.memory_space<vmem>>, vector<1x8x128xf32>,
    %c1 = arith.constant 1 : index
    %c0_13 = arith.constant 0 : index
    %c0_14 = arith.constant 0 : index
    %24 = vector.load %arg4[%c1, %c0_13, %c0_14] : memref<3x8x128xf32, #tpu.memory_space<vmem>>, vector<1x8x128xf32>
    %25 = vector.shape_cast %24 : vector<1x8x128xf32> to vector<8x128xf32>
    %26 = arith.mulf %3, %4 : vector<16x128xf32>
    %27 = vector.shape_cast %26 : vector<16x128xf32> to vector<2x8x128xf32>
    %cst_15 = arith.constant dense<0.000000e+00> : vector<8x128xf32>
    %28 = vector.multi_reduction <add>, %27, %cst_15 [0] : vector<2x8x128xf32> to vector<8x128xf32>
    %29 = arith.addf %25, %28 : vector<8x128xf32>
    %c1_16 = arith.constant 1 : index
    %c0_17 = arith.constant 0 : index
    %c0_18 = arith.constant 0 : index
    %30 = vector.load %arg4[%c1_16, %c0_17, %c0_18] : memref<3x8x128xf32, #tpu.memory_space<vmem>>, vector<1x8x128xf32>
    %31 = vector.shape_cast %30 : vector<1x8x128xf32> to vector<8x128xf32>
    %32 = vector.shape_cast %29 : vector<8x128xf32> to vector<1x8x128xf32>
    tpu.vector_store %arg4[%c1_16, %c0_17, %c0_18], %32 {strides = array<i32>} : memref<3x8x128xf32, #tpu.memory_space<vmem>>, vector<1x8x128xf32>,
    %c2 = arith.constant 2 : index
    %c0_19 = arith.constant 0 : index
    %c0_20 = arith.constant 0 : index
    %33 = vector.load %arg4[%c2, %c0_19, %c0_20] : memref<3x8x128xf32, #tpu.memory_space<vmem>>, vector<1x8x128xf32>
    %34 = vector.shape_cast %33 : vector<1x8x128xf32> to vector<8x128xf32>
    %35 = arith.addf %3, %4 : vector<16x128xf32>
    %36 = vector.shape_cast %35 : vector<16x128xf32> to vector<2x8x128xf32>
    %cst_21 = arith.constant dense<0.000000e+00> : vector<8x128xf32>
    %37 = vector.multi_reduction <add>, %36, %cst_21 [0] : vector<2x8x128xf32> to vector<8x128xf32>
    %38 = arith.addf %34, %37 : vector<8x128xf32>
    %c2_22 = arith.constant 2 : index
    %c0_23 = arith.constant 0 : index
    %c0_24 = arith.constant 0 : index
    %39 = vector.load %arg4[%c2_22, %c0_23, %c0_24] : memref<3x8x128xf32, #tpu.memory_space<vmem>>, vector<1x8x128xf32>
    %40 = vector.shape_cast %39 : vector<1x8x128xf32> to vector<8x128xf32>
    %41 = vector.shape_cast %38 : vector<8x128xf32> to vector<1x8x128xf32>
    tpu.vector_store %arg4[%c2_22, %c0_23, %c0_24], %41 {strides = array<i32>} : memref<3x8x128xf32, #tpu.memory_space<vmem>>, vector<1x8x128xf32>,
    %c0_i32_25 = arith.constant 0 : i32
    %42 = arith.cmpi eq, %arg0, %c0_i32_25 : i32
    %43 = arith.extui %42 : i1 to i32
    %c0_i32_26 = arith.constant 0 : i32
    %44 = arith.cmpi ne, %43, %c0_i32_26 : i32
    scf.if %44 {
      %c0_27 = arith.constant 0 : index
      %c0_28 = arith.constant 0 : index
      %c0_29 = arith.constant 0 : index
      %45 = vector.load %arg4[%c0_27, %c0_28, %c0_29] : memref<3x8x128xf32, #tpu.memory_space<vmem>>, vector<1x8x128xf32>
      %46 = vector.shape_cast %45 : vector<1x8x128xf32> to vector<8x128xf32>
      %47 = vector.shape_cast %46 : vector<8x128xf32> to vector<1x8x128xf32>
      %cst_30 = arith.constant dense<0.000000e+00> : vector<1xf32>
      %48 = vector.multi_reduction <add>, %47, %cst_30 [1, 2] : vector<1x8x128xf32> to vector<1xf32>
      %49 = vector.shape_cast %48 : vector<1xf32> to vector<1x1x1xf32>
      %50 = vector.extract %49[0, 0, 0] : f32 from vector<1x1x1xf32>
      %c0_31 = arith.constant 0 : index
      %51 = memref.load %arg3[%c0_31] : memref<3xf32, #tpu.memory_space<smem>>
      memref.store %50, %arg3[%c0_31] : memref<3xf32, #tpu.memory_space<smem>>
      %c1_32 = arith.constant 1 : index
      %c0_33 = arith.constant 0 : index
      %c0_34 = arith.constant 0 : index
      %52 = vector.load %arg4[%c1_32, %c0_33, %c0_34] : memref<3x8x128xf32, #tpu.memory_space<vmem>>, vector<1x8x128xf32>
      %53 = vector.shape_cast %52 : vector<1x8x128xf32> to vector<8x128xf32>
      %54 = vector.shape_cast %53 : vector<8x128xf32> to vector<1x8x128xf32>
      %cst_35 = arith.constant dense<0.000000e+00> : vector<1xf32>
      %55 = vector.multi_reduction <add>, %54, %cst_35 [1, 2] : vector<1x8x128xf32> to vector<1xf32>
      %56 = vector.shape_cast %55 : vector<1xf32> to vector<1x1x1xf32>
      %57 = vector.extract %56[0, 0, 0] : f32 from vector<1x1x1xf32>
      %c1_36 = arith.constant 1 : index
      %58 = memref.load %arg3[%c1_36] : memref<3xf32, #tpu.memory_space<smem>>
      memref.store %57, %arg3[%c1_36] : memref<3xf32, #tpu.memory_space<smem>>
      %c2_37 = arith.constant 2 : index
      %c0_38 = arith.constant 0 : index
      %c0_39 = arith.constant 0 : index
      %59 = vector.load %arg4[%c2_37, %c0_38, %c0_39] : memref<3x8x128xf32, #tpu.memory_space<vmem>>, vector<1x8x128xf32>
      %60 = vector.shape_cast %59 : vector<1x8x128xf32> to vector<8x128xf32>
      %61 = vector.shape_cast %60 : vector<8x128xf32> to vector<1x8x128xf32>
      %cst_40 = arith.constant dense<0.000000e+00> : vector<1xf32>
      %62 = vector.multi_reduction <add>, %61, %cst_40 [1, 2] : vector<1x8x128xf32> to vector<1xf32>
      %63 = vector.shape_cast %62 : vector<1xf32> to vector<1x1x1xf32>
      %64 = vector.extract %63[0, 0, 0] : f32 from vector<1x1x1xf32>
      %c2_41 = arith.constant 2 : index
      %65 = memref.load %arg3[%c2_41] : memref<3xf32, #tpu.memory_space<smem>>
      memref.store %64, %arg3[%c2_41] : memref<3xf32, #tpu.memory_space<smem>>
    } else {
    }
    return
  }
  func.func @transform_0(%arg0: i32) -> (i32, i32) {
    %c0_i32 = arith.constant 0 : i32
    %c0_i32_0 = arith.constant 0 : i32
    return %arg0, %c0_i32 : i32, i32
  }
  func.func @transform_1(%arg0: i32) -> (i32, i32) {
    %c0_i32 = arith.constant 0 : i32
    %c0_i32_0 = arith.constant 0 : i32
    return %arg0, %c0_i32 : i32, i32
  }
  func.func @transform_2(%arg0: i32) -> i32 {
    %c0_i32 = arith.constant 0 : i32
    %c0_i32_0 = arith.constant 0 : i32
    return %c0_i32 : i32
  }
}

</mosaic_0001>

<llo_original>
// kernel: tpu_custom_call.1
$region0: #{tpu_custom_call.1}
  #allocation0 [shape = 'u32[]', space=smem, size = 0x4, offset = 0x4, fixed_abs, tag = 'smem constant byte address 0x4 - core index']
  #allocation1 [shape = 'u32[144,128]{1,0:T(1,128)}', space=vmem, size = 0x12000, scoped, tag = 'internal scratch']
  #allocation2 [shape = 'f32[3,8,128]{2,1,0:T(8,128)}', space=vmem, size = 0x3000, scoped, tag = 'scratch operand']
  %s0 = inlined_call_operand.hbm [shape: f32[16,128], index: 0, kind: input, shape index: {}]
  %s1 = inlined_call_operand.hbm [shape: f32[16,128], index: 1, kind: input, shape index: {}]
  %s2 = inlined_call_operand.hbm [shape: f32[3], index: 2, kind: output, shape index: {}]
  %s3 = sld [smem:[#allocation0]]
  $region34: #{tpu_custom_call.1} parent=0
    _
  %s5 = ssub.s32 1, %s3
  %s6 = scalar_select 0, %s5, %s3
  $region1: #{tpu_custom_call.1} parent=0
    #allocation3 [shape = 'u8[8192]{0}', space=vmem, size = 0x2000, scoped, tag = 'input window, operand 0, single buffered']
    #allocation4 [shape = 's32[1]{0}', space=sflag, size = 0x4, scoped, tag = 'scoped memory for tpu_custom_call.1']
    #allocation5 [shape = 's32[1]{0}', space=sflag, size = 0x4, scoped, tag = 'scoped memory for tpu_custom_call.1']
    #allocation6 [shape = 'u8[8192]{0}', space=vmem, size = 0x2000, scoped, tag = 'input window, operand 1, single buffered']
    #allocation7 [shape = 's32[1]{0}', space=sflag, size = 0x4, scoped, tag = 'scoped memory for tpu_custom_call.1']
    #allocation8 [shape = 'u8[512]{0}', space=smem, size = 0x200, scoped, tag = 'output window, operand 0, single buffered']
    %7 = vsyncpa [#allocation4], 0
    %8 = vsyncpa [#allocation7], 0
    %9 = vsyncpa [#allocation5], 0
    // Predicated region
    $region2: #{tpu_custom_call.1} parent=1 // pred_check
      _
    $region3: #{tpu_custom_call.1} parent=1 // pred_check_branch
      %11 = sbr.rel (0) target = $region5
    $region4: #{tpu_custom_call.1} parent=1 // pred_region
      %s13 = ssub.s32 256, 256
      %14 = vsyncadd [#allocation4], %s13
      %s15 = sshll.u32 [#allocation3], 4
      %s16 = int_to_ptr.vmem [resolvable:$true] %s15
      %21 = dma.hbm_to_vmem [thread:$0]  %s0, 256, %s16, [#allocation4], 128, 128, 8
    $region5: #{tpu_custom_call.1} parent=1 // pred_fallthru
      _
    // Predicated region
    $region6: #{tpu_custom_call.1} parent=1 // pred_check
      _
    $region7: #{tpu_custom_call.1} parent=1 // pred_check_branch
      %23 = sbr.rel (0) target = $region9
    $region8: #{tpu_custom_call.1} parent=1 // pred_region
      %s25 = ssub.s32 256, 256
      %26 = vsyncadd [#allocation7], %s25
      %s27 = sshll.u32 [#allocation6], 4
      %s28 = int_to_ptr.vmem [resolvable:$true] %s27
      %33 = dma.hbm_to_vmem [thread:$0]  %s1, 256, %s28, [#allocation7], 128, 128, 8
    $region9: #{tpu_custom_call.1} parent=1 // pred_fallthru
      _
    // Predicated region
    $region10: #{tpu_custom_call.1} parent=1 // pred_check
      _
    $region11: #{tpu_custom_call.1} parent=1 // pred_check_branch
      %35 = sbr.rel (0) target = $region13
    $region12: #{tpu_custom_call.1} parent=1 // pred_region
      %36 = dma.done [#allocation4], 256
    $region13: #{tpu_custom_call.1} parent=1 // pred_fallthru
      _
    // Predicated region
    $region14: #{tpu_custom_call.1} parent=1 // pred_check
      _
    $region15: #{tpu_custom_call.1} parent=1 // pred_check_branch
      %38 = sbr.rel (0) target = $region17
    $region16: #{tpu_custom_call.1} parent=1 // pred_region
      %39 = dma.done [#allocation7], 256
    $region17: #{tpu_custom_call.1} parent=1 // pred_fallthru
      _
    %p40 = scmp.eq.s32.totalorder 0, 0
    // Predicated region
    $region18: #{tpu_custom_call.1} parent=1 // pred_check
      %p41 = pneg %p40
    $region19: #{tpu_custom_call.1} parent=1 // pred_check_branch
      %43 = sbr.rel (%p41) target = $region21
    $region20: #{tpu_custom_call.1} parent=1 // pred_region
      %44 = vst [vmem:[#allocation2] sm:$0xff] 0.0
      %45 = vst [vmem:[#allocation2 + $0x8] sm:$0xff] 0.0
      %46 = vst [vmem:[#allocation2 + $0x10] sm:$0xff] 0.0
    $region21: #{tpu_custom_call.1} parent=1 // pred_fallthru
      _
    %v47 = vld [vmem:[#allocation3] sm:$0xff]
    %v48 = vld [vmem:[#allocation3 + $0x8] sm:$0xff]
    %v49 = vld [vmem:[#allocation6] sm:$0xff]
    %v50 = vld [vmem:[#allocation6 + $0x8] sm:$0xff]
    %v51 = vlog2.pop %v47
    %v52 = vmul.f32 %v51, 0.6931472
    %v53 = vlog2.pop %v48
    %v54 = vmul.f32 %v53, 0.6931472
    %v55 = vmax.f32 %v52, -100.0
    %v56 = vmax.f32 %v54, -100.0
    %v57 = vsub.f32 1.0, %v47
    %v58 = vsub.f32 1.0, %v48
    %v59 = vlog2.pop %v57
    %v60 = vmul.f32 %v59, 0.6931472
    %v61 = vlog2.pop %v58
    %v62 = vmul.f32 %v61, 0.6931472
    %v63 = vmax.f32 %v60, -100.0
    %v64 = vmax.f32 %v62, -100.0
    %v65 = vsub.f32 %v63, %v55
    %v66 = vsub.f32 %v64, %v56
    %v67 = vmul.f32 %v49, %v65
    %v68 = vmul.f32 %v50, %v66
    %v69 = vsub.f32 %v67, %v63
    %v70 = vsub.f32 %v68, %v64
    %v71 = vld [vmem:[#allocation2] sm:$0xff]
    %v72 = vadd.f32 %v69, %v70
    %v73 = vadd.f32 %v71, %v72
    %74 = vst [vmem:[#allocation2] sm:$0xff] %v73
    %s75 = scalar_lea.vmem [#allocation2], 8
    %v76 = vld [vmem:[%s75] sm:$0xff]
    %v77 = vmul.f32 %v47, %v49
    %v78 = vmul.f32 %v48, %v50
    %v79 = vadd.f32 %v77, %v78
    %v80 = vadd.f32 %v76, %v79
    %81 = vst [vmem:[%s75] sm:$0xff] %v80
    %s82 = scalar_lea.vmem [#allocation2], 16
    %v83 = vld [vmem:[%s82] sm:$0xff]
    %v84 = vadd.f32 %v47, %v49
    %v85 = vadd.f32 %v48, %v50
    %v86 = vadd.f32 %v84, %v85
    %v87 = vadd.f32 %v83, %v86
    %88 = vst [vmem:[%s82] sm:$0xff] %v87
    // Predicated region
    $region22: #{tpu_custom_call.1} parent=1 // pred_check
      %p89 = pneg %p40
    $region23: #{tpu_custom_call.1} parent=1 // pred_check_branch
      %91 = sbr.rel (%p89) target = $region25
    $region24: #{tpu_custom_call.1} parent=1 // pred_region
      %v92 = vld [vmem:[#allocation2] sm:$0xff]
      %93 = vadd.xlane.f32.xlu0 %v92
      %v94 = vpop.xlane.xlu0 %93
      %v95 = vrot.slane %v94, 4
      %v96 = vadd.f32 %v94, %v95
      %v97 = vrot.slane %v96, 2
      %v98 = vadd.f32 %v96, %v97
      %v99 = vrot.slane %v98, 1
      %v100 = vadd.f32 %v98, %v99
      %s101 = vtos %v100
      %s102 = scalar_lea.smem [#allocation8], 0
      %103 = sst [smem:[%s102]] %s101
      %v104 = vld [vmem:[%s75] sm:$0xff]
      %105 = vadd.xlane.f32.xlu0 %v104
      %v106 = vpop.xlane.xlu0 %105
      %v107 = vrot.slane %v106, 4
      %v108 = vadd.f32 %v106, %v107
      %v109 = vrot.slane %v108, 2
      %v110 = vadd.f32 %v108, %v109
      %v111 = vrot.slane %v110, 1
      %v112 = vadd.f32 %v110, %v111
      %s113 = vtos %v112
      %s114 = scalar_lea.smem [#allocation8], 1
      %115 = sst [smem:[%s114]] %s113
      %v116 = vld [vmem:[%s82] sm:$0xff]
      %117 = vadd.xlane.f32.xlu0 %v116
      %v118 = vpop.xlane.xlu0 %117
      %v119 = vrot.slane %v118, 4
      %v120 = vadd.f32 %v118, %v119
      %v121 = vrot.slane %v120, 2
      %v122 = vadd.f32 %v120, %v121
      %v123 = vrot.slane %v122, 1
      %v124 = vadd.f32 %v122, %v123
      %s125 = vtos %v124
      %s126 = scalar_lea.smem [#allocation8], 2
      %127 = sst [smem:[%s126]] %s125
    $region25: #{tpu_custom_call.1} parent=1 // pred_fallthru
      _
    // Predicated region
    $region26: #{tpu_custom_call.1} parent=1 // pred_check
      _
    $region27: #{tpu_custom_call.1} parent=1 // pred_check_branch
      %129 = sbr.rel (0) target = $region29
    $region28: #{tpu_custom_call.1} parent=1 // pred_region
      %s131 = ssub.s32 16, 16
      %132 = vsyncadd [#allocation5], %s131
      %135 = dma.smem_to_hbm [#allocation8], 16, %s2, [#allocation5]
    $region29: #{tpu_custom_call.1} parent=1 // pred_fallthru
      _
    // Predicated region
    $region30: #{tpu_custom_call.1} parent=1 // pred_check
      _
    $region31: #{tpu_custom_call.1} parent=1 // pred_check_branch
      %137 = sbr.rel (0) target = $region33
    $region32: #{tpu_custom_call.1} parent=1 // pred_region
      %138 = dma.done [#allocation5], 16
    $region33: #{tpu_custom_call.1} parent=1 // pred_fallthru
      _
    %139 = sfence
    %140 = vsyncpa [#allocation4], 1
    %141 = vsyncpa [#allocation7], 1
    %142 = vsyncpa [#allocation5], 1

</llo_original>
